<compile_context>
chip_gen: v5e
topology: v5e:2x2
jax: 0.10.0
libtpu: 0.0.40
codegen_flags: <defaults>
</compile_context>

<pallas_src>
import functools
from typing import NamedTuple

import jax
import jax.numpy as jnp
from jax.experimental import pallas as pl
from jax.experimental.pallas import tpu as pltpu

_LANE = 128
_MIB = 1024 * 1024


def _round_up(v, m):
    return (v + m - 1) // m * m


@functools.lru_cache(maxsize=None)
def _chip_traits():
    """Returns (vmem_capacity_bytes, bf16_elementwise_ok, wide_mxu)."""
    try:
        vmem = int(pltpu.get_tpu_info().vmem_capacity_bytes)
    except Exception:
        vmem = 64 * _MIB          # conservative (v7x per-TC size)
    try:
        kind = jax.devices()[0].device_kind.lower()
    except Exception:
        kind = ""
    # v5e and older: no bf16 VPU/EUP, 128-wide MXU passes. v6e/v7x: bf16 + 256.
    old_gen = any(t in kind for t in ("v2", "v3", "v4", "v5"))
    return vmem, not old_gen, not old_gen


# --------------------------------------------------------------------------- #
# Kernel bodies
# --------------------------------------------------------------------------- #
def _mlp_kernel(x_ref, w1_ref, b1_ref, w2_ref, b2_ref, o_ref, *,
                act_dtype, approx_gelu):
    # x: (tm, Cp), w1: (Cp, Hp), b1: (1, Hp) f32, w2: (Hp, Op), b2: (1, Op) f32
    h = jnp.dot(x_ref[...], w1_ref[...], preferred_element_type=jnp.float32)
    h = h.astype(act_dtype) + b1_ref[...].astype(act_dtype)
    h = jax.nn.gelu(h, approximate=approx_gelu)
    y = jnp.dot(h.astype(w2_ref.dtype), w2_ref[...],
                preferred_element_type=jnp.float32)
    y = y + b2_ref[...]
    o_ref[...] = y.astype(o_ref.dtype)        # Dropout(p=0.0) == identity


def _mlp_kernel_htiled(x_ref, w1_ref, b1_ref, w2_ref, b2_ref, o_ref, acc_ref, *,
                       act_dtype, approx_gelu):
    # Hidden dim tiled: y = sum_j GELU(x @ W1[:, j] + b1[j]) @ W2[j, :] + b2
    j = pl.program_id(1)
    h = jnp.dot(x_ref[...], w1_ref[...], preferred_element_type=jnp.float32)
    h = h.astype(act_dtype) + b1_ref[...].astype(act_dtype)
    h = jax.nn.gelu(h, approximate=approx_gelu)
    part = jnp.dot(h.astype(w2_ref.dtype), w2_ref[...],
                   preferred_element_type=jnp.float32)

    @pl.when(j == 0)
    def _():
        acc_ref[...] = part

    @pl.when(j != 0)
    def _():
        acc_ref[...] += part

    @pl.when(j == pl.num_programs(1) - 1)
    def _():
        o_ref[...] = (acc_ref[...] + b2_ref[...]).astype(o_ref.dtype)


# --------------------------------------------------------------------------- #
# Parameter preparation (padding / casting hoisted out of the per-call path)
# --------------------------------------------------------------------------- #
class MLPParams(NamedTuple):
    w1: jax.Array       # (Cp, Hp)  compute dtype, stored (in, out) = W_torch.T
    b1: jax.Array       # (1, Hp)   float32
    w2: jax.Array       # (Hp, Op)  compute dtype
    b2: jax.Array       # (1, Op)   float32
    in_dim: int
    hidden_dim: int
    out_dim: int
    use_pallas: bool


def prepare_mlp_params(w1, b1, w2, b2, *, compute_dtype=jnp.bfloat16):
    """Pad / cast the weights once. Weights are stored (in, out) = W_torch.T so
    the kernel computes x @ W + b, matching PyTorch nn.Linear."""
    C, H = w1.shape
    O = w2.shape[1]
    use_pallas = max(C, H, O) >= _LANE      # tiny widths: plain XLA is faster
    if use_pallas:
        _, _, wide_mxu = _chip_traits()
        # 256-wide MXU passes on v6e/v7x: widen the hidden dim (weights/VMEM
        # only, no extra activation HBM bytes). C / O stay 128-aligned so the
        # activation HBM traffic stays minimal.
        lane_h = 256 if (wide_mxu and H > _LANE) else _LANE
        Cp, Hp, Op = _round_up(C, _LANE), _round_up(H, lane_h), _round_up(O, _LANE)
    else:
        Cp, Hp, Op = C, H, O
    # Zero padding is exact: GELU(0) == 0 and zero weight rows/cols add nothing.
    w1p = jnp.pad(w1.astype(compute_dtype), ((0, Cp - C), (0, Hp - H)))
    w2p = jnp.pad(w2.astype(compute_dtype), ((0, Hp - H), (0, Op - O)))
    b1p = jnp.pad(b1.astype(jnp.float32), (0, Hp - H)).reshape(1, Hp)
    b2p = jnp.pad(b2.astype(jnp.float32), (0, Op - O)).reshape(1, Op)
    return MLPParams(w1p, b1p, w2p, b2p, C, H, O, use_pallas)


# --------------------------------------------------------------------------- #
# Forward
# --------------------------------------------------------------------------- #
_SINGLE_BUFFER_WEIGHTS_OK = None   # cached capability: pipeline_mode=pl.Buffered(1)


def mlp_forward(x, params: MLPParams, *, tm=None, approx_gelu=True,
                hidden_block=None):
    """x: (B, N, C) -> (B, N, out_dim).

    approx_gelu=True uses the tanh GELU (EUP, fast). Pass approx_gelu=False for
    exact-erf parity with PyTorch nn.GELU().
    """
    B, N, C = x.shape
    assert C == params.in_dim
    O = params.out_dim
    M = B * N

    if not params.use_pallas:
        # All widths < 128: lane padding + per-step overhead would dominate.
        h = jnp.dot(x.reshape(M, C).astype(params.w1.dtype), params.w1,
                    preferred_element_type=jnp.float32) + params.b1
        h = jax.nn.gelu(h, approximate=approx_gelu)
        y = jnp.dot(h.astype(params.w2.dtype), params.w2,
                    preferred_element_type=jnp.float32) + params.b2
        return y.astype(x.dtype).reshape(B, N, O)

    vmem_cap, bf16_elementwise, _ = _chip_traits()
    Cp, Hp = params.w1.shape
    Op = params.w2.shape[1]
    compute_dtype = params.w1.dtype
    itemsize = jnp.dtype(compute_dtype).itemsize
    out_dtype = x.dtype
    out_itemsize = jnp.dtype(out_dtype).itemsize

    # Elementwise (bias + GELU) dtype: bf16 on bf16-capable VPUs, f32 on v5e.
    act_dtype = (compute_dtype
                 if (bf16_elementwise and compute_dtype == jnp.bfloat16)
                 else jnp.float32)
    act_itemsize = jnp.dtype(act_dtype).itemsize

    # Row tile: 512 on 128-MiB-VMEM chips (v5e / v6e), 256 on v7x (64 MiB).
    sublane = max(8, 32 // itemsize)
    if tm is None:
        tm = 512 if vmem_cap >= 96 * _MIB else 256
    tm_eff = _round_up(min(tm, _round_up(M, sublane)), sublane)
    grid_m = pl.cdiv(M, tm_eff)

    budget = max(vmem_cap - 16 * _MIB, 32 * _MIB)

    def footprint(th, weight_bufs):
        weights = (Cp * th + th * Op) * itemsize * weight_bufs
        biases = (th + Op) * 4 * weight_bufs
        acts = 2 * tm_eff * (Cp * itemsize + Op * out_itemsize)   # dbl-buffered x/out
        hidden = tm_eff * th * (4 + act_itemsize + itemsize)      # f32 acc + copies
        acc = 0 if th == Hp else tm_eff * Op * 4
        return weights + biases + acts + hidden + acc

    # Hidden-dim tiling: keep weights resident when they fit, otherwise tile Hp
    # with an f32 accumulator (needed for wide layers on v7x's 64 MiB VMEM).
    if hidden_block is not None:
        th = int(hidden_block)
        if th % _LANE or Hp % th:
            raise ValueError(f"hidden_block must be a multiple of 128 dividing {Hp}")
    else:
        th = Hp
        n_lanes = Hp // _LANE
        for parts in range(1, n_lanes + 1):
            if n_lanes % parts:
                continue
            th = Hp // parts
            if 1.25 * footprint(th, 1 if th == Hp else 2) <= budget:
                break
    htiled = th != Hp

    x2 = x.reshape(M, C)
    if Cp != C:
        x2 = jnp.pad(x2, ((0, 0), (0, Cp - C)))   # exact: zero K-columns add 0
    x2 = x2.astype(compute_dtype)

    cost = pl.CostEstimate(
        flops=2 * M * (Cp * Hp + Hp * Op),
        transcendentals=M * Hp,
        bytes_accessed=(M * (Cp * itemsize + Op * out_itemsize)
                        + (Cp * Hp + Hp * Op) * itemsize + (Hp + Op) * 4))

    def run(single_buffer_weights):
        def const_spec(shape, index_map):
            if single_buffer_weights:
                return pl.BlockSpec(shape, index_map, pipeline_mode=pl.Buffered(1))
            return pl.BlockSpec(shape, index_map)

        if not htiled:
            wbufs = 1 if single_buffer_weights else 2
            vmem_limit = int(min(max(int(1.5 * footprint(Hp, wbufs)), 32 * _MIB),
                                 budget))
            kernel = functools.partial(_mlp_kernel, act_dtype=act_dtype,
                                       approx_gelu=approx_gelu)
            grid_spec = pltpu.PrefetchScalarGridSpec(
                num_scalar_prefetch=0,
                grid=(grid_m,),
                in_specs=[
                    pl.BlockSpec((tm_eff, Cp), lambda i: (i, 0)),   # x row tile
                    const_spec((Cp, Hp), lambda i: (0, 0)),         # fc1 weight
                    const_spec((1, Hp), lambda i: (0, 0)),          # fc1 bias
                    const_spec((Hp, Op), lambda i: (0, 0)),         # fc2 weight
                    const_spec((1, Op), lambda i: (0, 0)),          # fc2 bias
                ],
                out_specs=pl.BlockSpec((tm_eff, Op), lambda i: (i, 0)),
            )
            dims = ("parallel",)
        else:
            vmem_limit = int(min(max(int(1.5 * footprint(th, 2)), 32 * _MIB),
                                 budget))
            kernel = functools.partial(_mlp_kernel_htiled, act_dtype=act_dtype,
                                       approx_gelu=approx_gelu)
            grid_spec = pltpu.PrefetchScalarGridSpec(
                num_scalar_prefetch=0,
                grid=(grid_m, Hp // th),
                in_specs=[
                    pl.BlockSpec((tm_eff, Cp), lambda i, j: (i, 0)),
                    pl.BlockSpec((Cp, th), lambda i, j: (0, j)),
                    pl.BlockSpec((1, th), lambda i, j: (0, j)),
                    pl.BlockSpec((th, Op), lambda i, j: (j, 0)),
                    const_spec((1, Op), lambda i, j: (0, 0)),
                ],
                out_specs=pl.BlockSpec((tm_eff, Op), lambda i, j: (i, 0)),
                scratch_shapes=[pltpu.VMEM((tm_eff, Op), jnp.float32)],
            )
            dims = ("parallel", "arbitrary")

        return pl.pallas_call(
            kernel,
            out_shape=jax.ShapeDtypeStruct((M, Op), out_dtype),
            grid_spec=grid_spec,
            compiler_params=pltpu.CompilerParams(
                dimension_semantics=dims, vmem_limit_bytes=vmem_limit),
            cost_estimate=cost,
        )(x2, params.w1, params.b1, params.w2, params.b2)

    global _SINGLE_BUFFER_WEIGHTS_OK
    if _SINGLE_BUFFER_WEIGHTS_OK is None:
        try:
            out2 = run(True)
            _SINGLE_BUFFER_WEIGHTS_OK = True
        except Exception:
            # pipeline_mode=pl.Buffered(1) not supported on this jax/backend.
            _SINGLE_BUFFER_WEIGHTS_OK = False
            out2 = run(False)
    else:
        out2 = run(_SINGLE_BUFFER_WEIGHTS_OK)

    if Op != O:
        out2 = out2[:, :O]
    return out2.reshape(B, N, O)


# --------------------------------------------------------------------------- #
# Deterministic synthetic init matching nn.Linear shapes (stored as (in, out))
# --------------------------------------------------------------------------- #
def init_mlp_params(key, in_features, hidden_features=None, out_features=None,
                    dtype=jnp.float32):
    out_features = out_features or in_features
    hidden_features = hidden_features or in_features
    k1, k2, k3, k4 = jax.random.split(key, 4)
    lim1 = 1.0 / (in_features ** 0.5)
    lim2 = 1.0 / (hidden_features ** 0.5)
    w1 = jax.random.uniform(k1, (in_features, hidden_features), dtype, -lim1, lim1)
    b1 = jax.random.uniform(k2, (hidden_features,), dtype, -lim1, lim1)
    w2 = jax.random.uniform(k3, (hidden_features, out_features), dtype, -lim2, lim2)
    b2 = jax.random.uniform(k4, (out_features,), dtype, -lim2, lim2)
    return w1, b1, w2, b2


if __name__ == "__main__":
    key = jax.random.PRNGKey(0)
    k_x, k_p, k_x2, k_p2 = jax.random.split(key, 4)

    # FeedForward inside the decoder head is dim -> mlp_dim -> dim
    # (1080 -> 1080 -> 1080 in the real model); small lane-aligned stand-ins.
    B, N, C, H = 2, 8, 128, 256
    x = jax.random.normal(k_x, (B, N, C), dtype=jnp.float32)
    w1, b1, w2, b2 = init_mlp_params(k_p, C, hidden_features=H, out_features=C)

    def reference(xx, approx):
        h = jax.nn.gelu(xx.reshape(-1, C) @ w1 + b1, approximate=approx)
        return (h @ w2 + b2).reshape(B, N, C)

    # Fast path: bf16 MXU operands, bf16 elementwise (v6e/v7x), tanh GELU (EUP).
    p_bf16 = prepare_mlp_params(w1, b1, w2, b2, compute_dtype=jnp.bfloat16)
    out_bf16 = jax.block_until_ready(mlp_forward(x, p_bf16, approx_gelu=True))
    assert out_bf16.shape == (B, N, C)
    assert jnp.allclose(out_bf16, reference(x, True), atol=7.5e-2, rtol=7.5e-2)

    # f32 path with exact erf GELU (parity with PyTorch nn.GELU()).
    p_f32 = prepare_mlp_params(w1, b1, w2, b2, compute_dtype=jnp.float32)
    out_f32 = jax.block_until_ready(mlp_forward(x, p_f32, approx_gelu=False))
    assert out_f32.shape == (B, N, C)
    assert jnp.allclose(out_f32, reference(x, False), atol=2e-2, rtol=2e-2)

    # Forced hidden-dim (K) tiling exercises the accumulator kernel used when
    # resident weights would overflow VMEM (e.g. wide layers on v7x).
    out_kt = jax.block_until_ready(
        mlp_forward(x, p_f32, approx_gelu=False, hidden_block=128))
    assert jnp.allclose(out_kt, reference(x, False), atol=2e-2, rtol=2e-2)

    # Tiny widths (< 128 lanes) take the plain-XLA fallback path.
    C2, H2 = 32, 64
    x_small = jax.random.normal(k_x2, (B, N, C2), dtype=jnp.float32)
    ws1, bs1, ws2, bs2 = init_mlp_params(k_p2, C2, hidden_features=H2,
                                         out_features=C2)
    p_small = prepare_mlp_params(ws1, bs1, ws2, bs2, compute_dtype=jnp.float32)
    out_small = jax.block_until_ready(mlp_forward(x_small, p_small,
                                                  approx_gelu=False))
    ref_small = (jax.nn.gelu(x_small.reshape(-1, C2) @ ws1 + bs1,
                             approximate=False) @ ws2 + bs2).reshape(B, N, C2)
    assert jnp.allclose(out_small, ref_small, atol=2e-2, rtol=2e-2)

    print("KERNEL_OK")
</pallas_src>

<mosaic_0001>
module attributes {stable_mosaic.version = 11 : i64} {
  func.func @_mlp_kernel(%arg0: i32, %arg1: memref<16x128xbf16, #tpu.memory_space<vmem>>, %arg2: memref<128x256xbf16, #tpu.memory_space<vmem>>, %arg3: memref<1x256xf32, #tpu.memory_space<vmem>>, %arg4: memref<256x128xbf16, #tpu.memory_space<vmem>>, %arg5: memref<1x128xf32, #tpu.memory_space<vmem>>, %arg6: memref<16x128xf32, #tpu.memory_space<vmem>>) attributes {dimension_semantics = [#tpu.dimension_semantics<parallel>], iteration_bounds = array<i64: 1>, scalar_prefetch = 0 : i64, scratch_operands = 0 : i64, tpu.core_type = #tpu.core_type<tc>, window_params = [{transform_indices = @transform_0, window_bounds = array<i64: 16, 128>}, {pipeline_mode = #tpu.pipeline_mode<synchronous>, transform_indices = @transform_1, window_bounds = array<i64: 128, 256>}, {pipeline_mode = #tpu.pipeline_mode<synchronous>, transform_indices = @transform_2, window_bounds = array<i64: 1, 256>}, {pipeline_mode = #tpu.pipeline_mode<synchronous>, transform_indices = @transform_3, window_bounds = array<i64: 256, 128>}, {pipeline_mode = #tpu.pipeline_mode<synchronous>, transform_indices = @transform_4, window_bounds = array<i64: 1, 128>}, {transform_indices = @transform_5, window_bounds = array<i64: 16, 128>}]} {
    %c0 = arith.constant 0 : index
    %c0_0 = arith.constant 0 : index
    %0 = vector.load %arg1[%c0, %c0_0] : memref<16x128xbf16, #tpu.memory_space<vmem>>, vector<16x128xbf16>
    %c0_1 = arith.constant 0 : index
    %c0_2 = arith.constant 0 : index
    %1 = vector.load %arg2[%c0_1, %c0_2] : memref<128x256xbf16, #tpu.memory_space<vmem>>, vector<128x256xbf16>
    %cst = arith.constant dense<0.000000e+00> : vector<16x256xf32>
    %2 = tpu.matmul %0, %1, %cst {dimension_numbers = #tpu.dot_dimension_numbers<[1], [0], [0], [1], [0, 0, 1, 1], [], []>} : vector<16x128xbf16>, vector<128x256xbf16>, vector<16x256xf32> -> vector<16x256xf32>
    %3 = arith.truncf %2 : vector<16x256xf32> to vector<16x256xbf16>
    %c0_3 = arith.constant 0 : index
    %c0_4 = arith.constant 0 : index
    %4 = vector.load %arg3[%c0_3, %c0_4] : memref<1x256xf32, #tpu.memory_space<vmem>>, vector<1x256xf32>
    %5 = arith.truncf %4 : vector<1x256xf32> to vector<1x256xbf16>
    %6 = vector.broadcast %5 : vector<1x256xbf16> to vector<16x256xbf16>
    %7 = arith.addf %3, %6 : vector<16x256xbf16>
    %8 = arith.mulf %7, %7 : vector<16x256xbf16>
    %9 = arith.mulf %7, %8 : vector<16x256xbf16>
    %cst_5 = arith.constant 4.467770e-02 : bf16
    %10 = vector.broadcast %cst_5 : bf16 to vector<16x256xbf16>
    %11 = arith.mulf %10, %9 : vector<16x256xbf16>
    %12 = arith.addf %7, %11 : vector<16x256xbf16>
    %cst_6 = arith.constant 7.968750e-01 : bf16
    %13 = vector.broadcast %cst_6 : bf16 to vector<16x256xbf16>
    %14 = arith.mulf %13, %12 : vector<16x256xbf16>
    %15 = math.tanh %14 : vector<16x256xbf16>
    %cst_7 = arith.constant 1.000000e+00 : bf16
    %16 = vector.broadcast %cst_7 : bf16 to vector<16x256xbf16>
    %17 = arith.addf %16, %15 : vector<16x256xbf16>
    %cst_8 = arith.constant 5.000000e-01 : bf16
    %18 = vector.broadcast %cst_8 : bf16 to vector<16x256xbf16>
    %19 = arith.mulf %18, %17 : vector<16x256xbf16>
    %20 = arith.mulf %7, %19 : vector<16x256xbf16>
    %c0_9 = arith.constant 0 : index
    %c0_10 = arith.constant 0 : index
    %21 = vector.load %arg4[%c0_9, %c0_10] : memref<256x128xbf16, #tpu.memory_space<vmem>>, vector<256x128xbf16>
    %cst_11 = arith.constant dense<0.000000e+00> : vector<16x128xf32>
    %22 = tpu.matmul %20, %21, %cst_11 {dimension_numbers = #tpu.dot_dimension_numbers<[1], [0], [0], [1], [0, 0, 1, 1], [], []>} : vector<16x256xbf16>, vector<256x128xbf16>, vector<16x128xf32> -> vector<16x128xf32>
    %c0_12 = arith.constant 0 : index
    %c0_13 = arith.constant 0 : index
    %23 = vector.load %arg5[%c0_12, %c0_13] : memref<1x128xf32, #tpu.memory_space<vmem>>, vector<1x128xf32>
    %24 = vector.broadcast %23 : vector<1x128xf32> to vector<16x128xf32>
    %25 = arith.addf %22, %24 : vector<16x128xf32>
    %c0_14 = arith.constant 0 : index
    %c0_15 = arith.constant 0 : index
    %26 = vector.load %arg6[%c0_14, %c0_15] : memref<16x128xf32, #tpu.memory_space<vmem>>, vector<16x128xf32>
    tpu.vector_store %arg6[%c0_14, %c0_15], %25 {strides = array<i32>} : memref<16x128xf32, #tpu.memory_space<vmem>>, vector<16x128xf32>,
    return
  }
  func.func @transform_0(%arg0: i32) -> (i32, i32) {
    %c0_i32 = arith.constant 0 : i32
    %c0_i32_0 = arith.constant 0 : i32
    return %arg0, %c0_i32 : i32, i32
  }
  func.func @transform_1(%arg0: i32) -> (i32, i32) {
    %c0_i32 = arith.constant 0 : i32
    %c0_i32_0 = arith.constant 0 : i32
    %c0_i32_1 = arith.constant 0 : i32
    return %c0_i32, %c0_i32_0 : i32, i32
  }
  func.func @transform_2(%arg0: i32) -> (i32, i32) {
    %c0_i32 = arith.constant 0 : i32
    %c0_i32_0 = arith.constant 0 : i32
    %c0_i32_1 = arith.constant 0 : i32
    return %c0_i32, %c0_i32_0 : i32, i32
  }
  func.func @transform_3(%arg0: i32) -> (i32, i32) {
    %c0_i32 = arith.constant 0 : i32
    %c0_i32_0 = arith.constant 0 : i32
    %c0_i32_1 = arith.constant 0 : i32
    return %c0_i32, %c0_i32_0 : i32, i32
  }
  func.func @transform_4(%arg0: i32) -> (i32, i32) {
    %c0_i32 = arith.constant 0 : i32
    %c0_i32_0 = arith.constant 0 : i32
    %c0_i32_1 = arith.constant 0 : i32
    return %c0_i32, %c0_i32_0 : i32, i32
  }
  func.func @transform_5(%arg0: i32) -> (i32, i32) {
    %c0_i32 = arith.constant 0 : i32
    %c0_i32_0 = arith.constant 0 : i32
    return %arg0, %c0_i32 : i32, i32
  }
}

module attributes {stable_mosaic.version = 11 : i64} {
  func.func @_mlp_kernel(%arg0: i32, %arg1: memref<16x128xbf16, #tpu.memory_space<vmem>>, %arg2: memref<128x256xbf16, #tpu.memory_space<vmem>>, %arg3: memref<1x256xf32, #tpu.memory_space<vmem>>, %arg4: memref<256x128xbf16, #tpu.memory_space<vmem>>, %arg5: memref<1x128xf32, #tpu.memory_space<vmem>>, %arg6: memref<16x128xf32, #tpu.memory_space<vmem>>) attributes {dimension_semantics = [#tpu.dimension_semantics<parallel>], iteration_bounds = array<i64: 1>, scalar_prefetch = 0 : i64, scratch_operands = 0 : i64, tpu.core_type = #tpu.core_type<tc>, window_params = [{transform_indices = @transform_0, window_bounds = array<i64: 16, 128>}, {pipeline_mode = #tpu.pipeline_mode<synchronous>, transform_indices = @transform_1, window_bounds = array<i64: 128, 256>}, {pipeline_mode = #tpu.pipeline_mode<synchronous>, transform_indices = @transform_2, window_bounds = array<i64: 1, 256>}, {pipeline_mode = #tpu.pipeline_mode<synchronous>, transform_indices = @transform_3, window_bounds = array<i64: 256, 128>}, {pipeline_mode = #tpu.pipeline_mode<synchronous>, transform_indices = @transform_4, window_bounds = array<i64: 1, 128>}, {transform_indices = @transform_5, window_bounds = array<i64: 16, 128>}]} {
    %c0 = arith.constant 0 : index
    %c0_0 = arith.constant 0 : index
    %0 = vector.load %arg1[%c0, %c0_0] : memref<16x128xbf16, #tpu.memory_space<vmem>>, vector<16x128xbf16>
    %c0_1 = arith.constant 0 : index
    %c0_2 = arith.constant 0 : index
    %1 = vector.load %arg2[%c0_1, %c0_2] : memref<128x256xbf16, #tpu.memory_space<vmem>>, vector<128x256xbf16>
    %cst = arith.constant dense<0.000000e+00> : vector<16x256xf32>
    %2 = tpu.matmul %0, %1, %cst {dimension_numbers = #tpu.dot_dimension_numbers<[1], [0], [0], [1], [0, 0, 1, 1], [], []>} : vector<16x128xbf16>, vector<128x256xbf16>, vector<16x256xf32> -> vector<16x256xf32>
    %3 = arith.truncf %2 : vector<16x256xf32> to vector<16x256xbf16>
    %c0_3 = arith.constant 0 : index
    %c0_4 = arith.constant 0 : index
    %4 = vector.load %arg3[%c0_3, %c0_4] : memref<1x256xf32, #tpu.memory_space<vmem>>, vector<1x256xf32>
    %5 = arith.truncf %4 : vector<1x256xf32> to vector<1x256xbf16>
    %6 = vector.broadcast %5 : vector<1x256xbf16> to vector<16x256xbf16>
    %7 = arith.addf %3, %6 : vector<16x256xbf16>
    %8 = arith.mulf %7, %7 : vector<16x256xbf16>
    %9 = arith.mulf %7, %8 : vector<16x256xbf16>
    %cst_5 = arith.constant 4.467770e-02 : bf16
    %10 = vector.broadcast %cst_5 : bf16 to vector<16x256xbf16>
    %11 = arith.mulf %10, %9 : vector<16x256xbf16>
    %12 = arith.addf %7, %11 : vector<16x256xbf16>
    %cst_6 = arith.constant 7.968750e-01 : bf16
    %13 = vector.broadcast %cst_6 : bf16 to vector<16x256xbf16>
    %14 = arith.mulf %13, %12 : vector<16x256xbf16>
    %15 = math.tanh %14 : vector<16x256xbf16>
    %cst_7 = arith.constant 1.000000e+00 : bf16
    %16 = vector.broadcast %cst_7 : bf16 to vector<16x256xbf16>
    %17 = arith.addf %16, %15 : vector<16x256xbf16>
    %cst_8 = arith.constant 5.000000e-01 : bf16
    %18 = vector.broadcast %cst_8 : bf16 to vector<16x256xbf16>
    %19 = arith.mulf %18, %17 : vector<16x256xbf16>
    %20 = arith.mulf %7, %19 : vector<16x256xbf16>
    %c0_9 = arith.constant 0 : index
    %c0_10 = arith.constant 0 : index
    %21 = vector.load %arg4[%c0_9, %c0_10] : memref<256x128xbf16, #tpu.memory_space<vmem>>, vector<256x128xbf16>
    %cst_11 = arith.constant dense<0.000000e+00> : vector<16x128xf32>
    %22 = tpu.matmul %20, %21, %cst_11 {dimension_numbers = #tpu.dot_dimension_numbers<[1], [0], [0], [1], [0, 0, 1, 1], [], []>} : vector<16x256xbf16>, vector<256x128xbf16>, vector<16x128xf32> -> vector<16x128xf32>
    %c0_12 = arith.constant 0 : index
    %c0_13 = arith.constant 0 : index
    %23 = vector.load %arg5[%c0_12, %c0_13] : memref<1x128xf32, #tpu.memory_space<vmem>>, vector<1x128xf32>
    %24 = vector.broadcast %23 : vector<1x128xf32> to vector<16x128xf32>
    %25 = arith.addf %22, %24 : vector<16x128xf32>
    %c0_14 = arith.constant 0 : index
    %c0_15 = arith.constant 0 : index
    %26 = vector.load %arg6[%c0_14, %c0_15] : memref<16x128xf32, #tpu.memory_space<vmem>>, vector<16x128xf32>
    tpu.vector_store %arg6[%c0_14, %c0_15], %25 {strides = array<i32>} : memref<16x128xf32, #tpu.memory_space<vmem>>, vector<16x128xf32>,
    return
  }
  func.func @transform_0(%arg0: i32) -> (i32, i32) {
    %c0_i32 = arith.constant 0 : i32
    %c0_i32_0 = arith.constant 0 : i32
    return %arg0, %c0_i32 : i32, i32
  }
  func.func @transform_1(%arg0: i32) -> (i32, i32) {
    %c0_i32 = arith.constant 0 : i32
    %c0_i32_0 = arith.constant 0 : i32
    %c0_i32_1 = arith.constant 0 : i32
    return %c0_i32, %c0_i32_0 : i32, i32
  }
  func.func @transform_2(%arg0: i32) -> (i32, i32) {
    %c0_i32 = arith.constant 0 : i32
    %c0_i32_0 = arith.constant 0 : i32
    %c0_i32_1 = arith.constant 0 : i32
    return %c0_i32, %c0_i32_0 : i32, i32
  }
  func.func @transform_3(%arg0: i32) -> (i32, i32) {
    %c0_i32 = arith.constant 0 : i32
    %c0_i32_0 = arith.constant 0 : i32
    %c0_i32_1 = arith.constant 0 : i32
    return %c0_i32, %c0_i32_0 : i32, i32
  }
  func.func @transform_4(%arg0: i32) -> (i32, i32) {
    %c0_i32 = arith.constant 0 : i32
    %c0_i32_0 = arith.constant 0 : i32
    %c0_i32_1 = arith.constant 0 : i32
    return %c0_i32, %c0_i32_0 : i32, i32
  }
  func.func @transform_5(%arg0: i32) -> (i32, i32) {
    %c0_i32 = arith.constant 0 : i32
    %c0_i32_0 = arith.constant 0 : i32
    return %arg0, %c0_i32 : i32, i32
  }
}

</mosaic_0001>

<llo_original>
// kernel: tpu_custom_call.1
$region0: #{tpu_custom_call.1}
  #allocation0 [shape = 'u32[]', space=smem, size = 0x4, offset = 0x4, fixed_abs, tag = 'smem constant byte address 0x4 - core index']
  #allocation1 [shape = 'u32[72,128]{1,0:T(1,128)}', space=vmem, size = 0x9000, scoped, tag = 'internal scratch']
  %s0 = inlined_call_operand.hbm [shape: bf16[16,128], index: 0, kind: input, shape index: {}]
  %s1 = inlined_call_operand.hbm [shape: bf16[128,256], index: 1, kind: input, shape index: {}]
  %s2 = inlined_call_operand.hbm [shape: f32[1,256], index: 2, kind: input, shape index: {}]
  %s3 = inlined_call_operand.hbm [shape: bf16[256,128], index: 3, kind: input, shape index: {}]
  %s4 = inlined_call_operand.vmem [shape: f32[1,128], index: 4, kind: input, shape index: {}]
  %s5 = inlined_call_operand.hbm [shape: f32[16,128], index: 5, kind: output, shape index: {}]
  %s6 = sld [smem:[#allocation0]]
  $region46: #{tpu_custom_call.1} parent=0
    _
  %s8 = ssub.s32 1, %s6
  %s9 = scalar_select 0, %s8, %s6
  $region1: #{tpu_custom_call.1} parent=0
    #allocation2 [shape = 'u8[4096]{0}', space=vmem, size = 0x1000, scoped, tag = 'input window, operand 0, single buffered']
    #allocation3 [shape = 's32[1]{0}', space=sflag, size = 0x4, scoped, tag = 'scoped memory for tpu_custom_call.1']
    #allocation4 [shape = 's32[1]{0}', space=sflag, size = 0x4, scoped, tag = 'scoped memory for tpu_custom_call.1']
    #allocation5 [shape = 'u8[65536]{0}', space=vmem, size = 0x10000, scoped, tag = 'input window, operand 1, single buffered']
    #allocation6 [shape = 's32[1]{0}', space=sflag, size = 0x4, scoped, tag = 'scoped memory for tpu_custom_call.1']
    #allocation7 [shape = 'u8[1024]{0}', space=vmem, size = 0x400, scoped, tag = 'input window, operand 2, single buffered']
    #allocation8 [shape = 'u8[65536]{0}', space=vmem, size = 0x10000, scoped, tag = 'input window, operand 3, single buffered']
    #allocation9 [shape = 's32[1]{0}', space=sflag, size = 0x4, scoped, tag = 'scoped memory for tpu_custom_call.1']
    #allocation10 [shape = 'u8[8192]{0}', space=vmem, size = 0x2000, scoped, tag = 'output window, operand 0, single buffered']
    %10 = vsyncpa [#allocation3], 0
    %11 = vsyncpa [#allocation6], 0
    %12 = vsyncpa [#allocation9], 0
    %13 = vsyncpa [#allocation4], 0
    // Predicated region
    $region2: #{tpu_custom_call.1} parent=1 // pred_check
      _
    $region3: #{tpu_custom_call.1} parent=1 // pred_check_branch
      %15 = sbr.rel (0) target = $region5
    $region4: #{tpu_custom_call.1} parent=1 // pred_region
      %17 = vsyncadd [#allocation3], 0
      %s18 = sshll.u32 %s0, 4
      %s19 = int_to_ptr.hbm [resolvable:$true] %s18
      %s20 = sshll.u32 [#allocation2], 4
      %s21 = int_to_ptr.vmem [resolvable:$true] %s20
      %26 = dma.hbm_to_vmem [thread:$0]  %s19, 128, %s21, [#allocation3], 64, 64, 4
    $region5: #{tpu_custom_call.1} parent=1 // pred_fallthru
      _
    // Predicated region
    $region6: #{tpu_custom_call.1} parent=1 // pred_check
      _
    $region7: #{tpu_custom_call.1} parent=1 // pred_check_branch
      %28 = sbr.rel (0) target = $region9
    $region8: #{tpu_custom_call.1} parent=1 // pred_region
      %30 = vsyncadd [#allocation6], 0
      %s31 = sshll.u32 %s1, 4
      %s32 = int_to_ptr.hbm [resolvable:$true] %s31
      %s33 = sshll.u32 [#allocation5], 4
      %s34 = int_to_ptr.vmem [resolvable:$true] %s33
      %39 = dma.hbm_to_vmem [thread:$0]  %s32, 2048, %s34, [#allocation6], 128, 128, 8
    $region9: #{tpu_custom_call.1} parent=1 // pred_fallthru
      _
    // Predicated region
    $region10: #{tpu_custom_call.1} parent=1 // pred_check
      _
    $region11: #{tpu_custom_call.1} parent=1 // pred_check_branch
      %41 = sbr.rel (0) target = $region13
    $region12: #{tpu_custom_call.1} parent=1 // pred_region
      %43 = vsyncadd [#allocation6], 0
      %s45 = sshll.u32 %s2, 4
      %s46 = int_to_ptr.hbm [resolvable:$true] %s45
      %s47 = sshll.u32 [#allocation7], 4
      %s48 = int_to_ptr.vmem [resolvable:$true] %s47
      %50 = dma.hbm_to_vmem [thread:$0]  %s46, 32, %s48, [#allocation6]
    $region13: #{tpu_custom_call.1} parent=1 // pred_fallthru
      _
    // Predicated region
    $region14: #{tpu_custom_call.1} parent=1 // pred_check
      _
    $region15: #{tpu_custom_call.1} parent=1 // pred_check_branch
      %52 = sbr.rel (0) target = $region17
    $region16: #{tpu_custom_call.1} parent=1 // pred_region
      %54 = vsyncadd [#allocation9], 0
      %s55 = sshll.u32 %s3, 4
      %s56 = int_to_ptr.hbm [resolvable:$true] %s55
      %s57 = sshll.u32 [#allocation8], 4
      %s58 = int_to_ptr.vmem [resolvable:$true] %s57
      %63 = dma.hbm_to_vmem [thread:$0]  %s56, 2048, %s58, [#allocation9], 64, 64, 4
    $region17: #{tpu_custom_call.1} parent=1 // pred_fallthru
      _
    // Predicated region
    $region18: #{tpu_custom_call.1} parent=1 // pred_check
      _
    $region19: #{tpu_custom_call.1} parent=1 // pred_check_branch
      %65 = sbr.rel (0) target = $region21
    $region20: #{tpu_custom_call.1} parent=1 // pred_region
      _
    $region21: #{tpu_custom_call.1} parent=1 // pred_fallthru
      _
    // Predicated region
    $region22: #{tpu_custom_call.1} parent=1 // pred_check
      _
    $region23: #{tpu_custom_call.1} parent=1 // pred_check_branch
      %67 = sbr.rel (0) target = $region25
    $region24: #{tpu_custom_call.1} parent=1 // pred_region
      %69 = dma.done [#allocation3], 128
    $region25: #{tpu_custom_call.1} parent=1 // pred_fallthru
      _
    // Predicated region
    $region26: #{tpu_custom_call.1} parent=1 // pred_check
      _
    $region27: #{tpu_custom_call.1} parent=1 // pred_check_branch
      %71 = sbr.rel (0) target = $region29
    $region28: #{tpu_custom_call.1} parent=1 // pred_region
      %73 = dma.done [#allocation6], 2048
    $region29: #{tpu_custom_call.1} parent=1 // pred_fallthru
      _
    // Predicated region
    $region30: #{tpu_custom_call.1} parent=1 // pred_check
      _
    $region31: #{tpu_custom_call.1} parent=1 // pred_check_branch
      %75 = sbr.rel (0) target = $region33
    $region32: #{tpu_custom_call.1} parent=1 // pred_region
      %77 = dma.done [#allocation6], 32
    $region33: #{tpu_custom_call.1} parent=1 // pred_fallthru
      _
    // Predicated region
    $region34: #{tpu_custom_call.1} parent=1 // pred_check
      _
    $region35: #{tpu_custom_call.1} parent=1 // pred_check_branch
      %79 = sbr.rel (0) target = $region37
    $region36: #{tpu_custom_call.1} parent=1 // pred_region
      %81 = dma.done [#allocation9], 2048
    $region37: #{tpu_custom_call.1} parent=1 // pred_fallthru
      _
    %v82 = vld [vmem:[#allocation2] sm:$0xf]
    %v83 = vld [vmem:[#allocation2 + $0x4] sm:$0xf]
    %v84 = vld [vmem:[#allocation5] sm:$0xff]
    %v85 = vld [vmem:[#allocation5 + $0x8] sm:$0xff]
    %v86 = vld [vmem:[#allocation5 + $0x10] sm:$0xff]
    %v87 = vld [vmem:[#allocation5 + $0x18] sm:$0xff]
    %v88 = vld [vmem:[#allocation5 + $0x20] sm:$0xff]
    %v89 = vld [vmem:[#allocation5 + $0x28] sm:$0xff]
    %v90 = vld [vmem:[#allocation5 + $0x30] sm:$0xff]
    %v91 = vld [vmem:[#allocation5 + $0x38] sm:$0xff]
    %v92 = vld [vmem:[#allocation5 + $0x40] sm:$0xff]
    %v93 = vld [vmem:[#allocation5 + $0x48] sm:$0xff]
    %v94 = vld [vmem:[#allocation5 + $0x50] sm:$0xff]
    %v95 = vld [vmem:[#allocation5 + $0x58] sm:$0xff]
    %v96 = vld [vmem:[#allocation5 + $0x60] sm:$0xff]
    %v97 = vld [vmem:[#allocation5 + $0x68] sm:$0xff]
    %v98 = vld [vmem:[#allocation5 + $0x70] sm:$0xff]
    %v99 = vld [vmem:[#allocation5 + $0x78] sm:$0xff]
    %v102 = vunpack.c.l.b16 %v82
    %v103 = vunpack.c.l.b16 %v83
    %v104 = vpack.c.b16 %v103, %v102
    %v122 = vunpack.c.l.b16 %v84
    %v123 = vunpack.c.h.b16 %v84
    %v124 = vunpack.c.l.b16 %v85
    %v125 = vunpack.c.h.b16 %v85
    %v126 = vunpack.c.l.b16 %v86
    %v127 = vunpack.c.h.b16 %v86
    %v128 = vunpack.c.l.b16 %v87
    %v129 = vunpack.c.h.b16 %v87
    %v130 = vunpack.c.l.b16 %v88
    %v131 = vunpack.c.h.b16 %v88
    %v132 = vunpack.c.l.b16 %v89
    %v133 = vunpack.c.h.b16 %v89
    %v134 = vunpack.c.l.b16 %v90
    %v135 = vunpack.c.h.b16 %v90
    %v136 = vunpack.c.l.b16 %v91
    %v137 = vunpack.c.h.b16 %v91
    %v138 = vunpack.c.l.b16 %v92
    %v139 = vunpack.c.h.b16 %v92
    %v140 = vunpack.c.l.b16 %v93
    %v141 = vunpack.c.h.b16 %v93
    %v142 = vunpack.c.l.b16 %v94
    %v143 = vunpack.c.h.b16 %v94
    %v144 = vunpack.c.l.b16 %v95
    %v145 = vunpack.c.h.b16 %v95
    %v146 = vunpack.c.l.b16 %v96
    %v147 = vunpack.c.h.b16 %v96
    %v148 = vunpack.c.l.b16 %v97
    %v149 = vunpack.c.h.b16 %v97
    %v150 = vunpack.c.l.b16 %v98
    %v151 = vunpack.c.h.b16 %v98
    %v152 = vunpack.c.l.b16 %v99
    %v153 = vunpack.c.h.b16 %v99
    %v154 = vpack.c.b16 %v124, %v122
    %v155 = vpack.c.b16 %v125, %v123
    %v156 = vpack.c.b16 %v128, %v126
    %v157 = vpack.c.b16 %v129, %v127
    %v158 = vpack.c.b16 %v132, %v130
    %v159 = vpack.c.b16 %v133, %v131
    %v160 = vpack.c.b16 %v136, %v134
    %v161 = vpack.c.b16 %v137, %v135
    %v162 = vpack.c.b16 %v140, %v138
    %v163 = vpack.c.b16 %v141, %v139
    %v164 = vpack.c.b16 %v144, %v142
    %v165 = vpack.c.b16 %v145, %v143
    %v166 = vpack.c.b16 %v148, %v146
    %v167 = vpack.c.b16 %v149, %v147
    %v168 = vpack.c.b16 %v152, %v150
    %v169 = vpack.c.b16 %v153, %v151
    %186 = vmatpush.bf16.msra.mxu0 %v168
    %187 = vmatpush.bf16.msra.mxu0 %v166
    %188 = vmatpush.bf16.msra.mxu0 %v164
    %189 = vmatpush.bf16.msra.mxu0 %v162
    %190 = vmatpush.bf16.msra.mxu0 %v160
    %191 = vmatpush.bf16.msra.mxu0 %v158
    %192 = vmatpush.bf16.msra.mxu0 %v156
    %193 = vmatpush.bf16.msra.mxu0 %v154
    %194 = vmatmul.bf16.gmra.mxu0 %v104
    %v195 = vpop.f32.mrf.mxu0
    %v196 = vadd.f32 0.0, %v195
    %v197 = vpop.f32.mrf.mxu0
    %v198 = vadd.f32 0.0, %v197
    %199 = vdwg.mxu0
    %200 = vmatpush.bf16.msra.mxu0 %v169
    %201 = vmatpush.bf16.msra.mxu0 %v167
    %202 = vmatpush.bf16.msra.mxu0 %v165
    %203 = vmatpush.bf16.msra.mxu0 %v163
    %204 = vmatpush.bf16.msra.mxu0 %v161
    %205 = vmatpush.bf16.msra.mxu0 %v159
    %206 = vmatpush.bf16.msra.mxu0 %v157
    %207 = vmatpush.bf16.msra.mxu0 %v155
    %208 = vmatmul.bf16.gmra.mxu0 %v104
    %v209 = vpop.f32.mrf.mxu0
    %v210 = vadd.f32 0.0, %v209
    %v211 = vpop.f32.mrf.mxu0
    %v212 = vadd.f32 0.0, %v211
    %213 = vdwg.mxu0
    %v214 = vpack.c.bf16 %v210, %v196
    %v215 = vpack.c.bf16 %v212, %v198
    %v216 = vld [vmem:[#allocation7] sm:$0x3]
    %v218 = vperm.slane %v216, 0
    %v219 = vperm.slane %v216, 1
    %v222 = vpack.c.bf16 %v219, %v218
    %v224 = vunpack.c.l.b16 %v222
    %v225 = vunpack.c.h.b16 %v222
    %v226 = vpack.c.b16 %v224, %v224
    %v227 = vpack.c.b16 %v225, %v225
    %v229 = vpack.i.b16 %v226, %v226
    %v231 = vperm.slane %v229, 0
    %v233 = vpack.i.b16 %v227, %v227
    %v235 = vperm.slane %v233, 0
    %v236 = vunpack.c.l.bf16 %v214
    %v237 = vunpack.c.h.bf16 %v214
    %v238 = vunpack.c.l.bf16 %v215
    %v239 = vunpack.c.h.bf16 %v215
    %v240 = vunpack.c.l.bf16 %v231
    %v241 = vunpack.c.l.bf16 %v235
    %v242 = vadd.f32 %v236, %v240
    %v243 = vadd.f32 %v237, %v241
    %v244 = vadd.f32 %v238, %v240
    %v245 = vadd.f32 %v239, %v241
    %v246 = vpack.c.bf16 %v243, %v242
    %v247 = vpack.c.bf16 %v245, %v244
    %v248 = vunpack.c.l.bf16 %v246
    %v249 = vunpack.c.h.bf16 %v246
    %v250 = vunpack.c.l.bf16 %v247
    %v251 = vunpack.c.h.bf16 %v247
    %v252 = vmul.f32 %v248, %v248
    %v253 = vmul.f32 %v249, %v249
    %v254 = vmul.f32 %v250, %v250
    %v255 = vmul.f32 %v251, %v251
    %v256 = vpack.c.bf16 %v253, %v252
    %v257 = vpack.c.bf16 %v255, %v254
    %v258 = vunpack.c.l.bf16 %v256
    %v259 = vunpack.c.h.bf16 %v256
    %v260 = vunpack.c.l.bf16 %v257
    %v261 = vunpack.c.h.bf16 %v257
    %v262 = vmul.f32 %v248, %v258
    %v263 = vmul.f32 %v249, %v259
    %v264 = vmul.f32 %v250, %v260
    %v265 = vmul.f32 %v251, %v261
    %v266 = vpack.c.bf16 %v263, %v262
    %v267 = vpack.c.bf16 %v265, %v264
    %v268 = vunpack.c.l.bf16 %v266
    %v269 = vunpack.c.h.bf16 %v266
    %v270 = vunpack.c.l.bf16 %v267
    %v271 = vunpack.c.h.bf16 %v267
    %v272 = vmul.f32 %v268, 0.044677734
    %v273 = vmul.f32 %v269, 0.044677734
    %v274 = vmul.f32 %v270, 0.044677734
    %v275 = vmul.f32 %v271, 0.044677734
    %v276 = vpack.c.bf16 %v273, %v272
    %v277 = vpack.c.bf16 %v275, %v274
    %v278 = vunpack.c.l.bf16 %v276
    %v279 = vunpack.c.h.bf16 %v276
    %v280 = vunpack.c.l.bf16 %v277
    %v281 = vunpack.c.h.bf16 %v277
    %v282 = vadd.f32 %v248, %v278
    %v283 = vadd.f32 %v249, %v279
    %v284 = vadd.f32 %v250, %v280
    %v285 = vadd.f32 %v251, %v281
    %v286 = vpack.c.bf16 %v283, %v282
    %v287 = vpack.c.bf16 %v285, %v284
    %v288 = vunpack.c.l.bf16 %v286
    %v289 = vunpack.c.h.bf16 %v286
    %v290 = vunpack.c.l.bf16 %v287
    %v291 = vunpack.c.h.bf16 %v287
    %v292 = vmul.f32 %v288, 0.796875
    %v293 = vmul.f32 %v289, 0.796875
    %v294 = vmul.f32 %v290, 0.796875
    %v295 = vmul.f32 %v291, 0.796875
    %v296 = vpack.c.bf16 %v293, %v292
    %v297 = vpack.c.bf16 %v295, %v294
    %v298 = vunpack.c.l.bf16 %v296
    %v299 = vunpack.c.h.bf16 %v296
    %v300 = vunpack.c.l.bf16 %v297
    %v301 = vunpack.c.h.bf16 %v297
    %v302 = vtanh.pop %v298
    %v303 = vtanh.pop %v299
    %v304 = vtanh.pop %v300
    %v305 = vtanh.pop %v301
    %v306 = vpack.c.bf16 %v303, %v302
    %v307 = vpack.c.bf16 %v305, %v304
    %v308 = vunpack.c.l.bf16 %v306
    %v309 = vunpack.c.h.bf16 %v306
    %v310 = vunpack.c.l.bf16 %v307
    %v311 = vunpack.c.h.bf16 %v307
    %v312 = vadd.f32 %v308, 1.0
    %v313 = vadd.f32 %v309, 1.0
    %v314 = vadd.f32 %v310, 1.0
    %v315 = vadd.f32 %v311, 1.0
    %v316 = vpack.c.bf16 %v313, %v312
    %v317 = vpack.c.bf16 %v315, %v314
    %v318 = vunpack.c.l.bf16 %v316
    %v319 = vunpack.c.h.bf16 %v316
    %v320 = vunpack.c.l.bf16 %v317
    %v321 = vunpack.c.h.bf16 %v317
    %v322 = vmul.f32 %v318, 0.5
    %v323 = vmul.f32 %v319, 0.5
    %v324 = vmul.f32 %v320, 0.5
    %v325 = vmul.f32 %v321, 0.5
    %v326 = vpack.c.bf16 %v323, %v322
    %v327 = vpack.c.bf16 %v325, %v324
    %v328 = vunpack.c.l.bf16 %v326
    %v329 = vunpack.c.h.bf16 %v326
    %v330 = vunpack.c.l.bf16 %v327
    %v331 = vunpack.c.h.bf16 %v327
    %v332 = vmul.f32 %v248, %v328
    %v333 = vmul.f32 %v249, %v329
    %v334 = vmul.f32 %v250, %v330
    %v335 = vmul.f32 %v251, %v331
    %v336 = vpack.c.bf16 %v334, %v332
    %v337 = vpack.c.bf16 %v335, %v333
    %v338 = vld [vmem:[#allocation8] sm:$0xf]
    %v339 = vld [vmem:[#allocation8 + $0x4] sm:$0xf]
    %v340 = vld [vmem:[#allocation8 + $0x8] sm:$0xf]
    %v341 = vld [vmem:[#allocation8 + $0xc] sm:$0xf]
    %v342 = vld [vmem:[#allocation8 + $0x10] sm:$0xf]
    %v343 = vld [vmem:[#allocation8 + $0x14] sm:$0xf]
    %v344 = vld [vmem:[#allocation8 + $0x18] sm:$0xf]
    %v345 = vld [vmem:[#allocation8 + $0x1c] sm:$0xf]
    %v346 = vld [vmem:[#allocation8 + $0x20] sm:$0xf]
    %v347 = vld [vmem:[#allocation8 + $0x24] sm:$0xf]
    %v348 = vld [vmem:[#allocation8 + $0x28] sm:$0xf]
    %v349 = vld [vmem:[#allocation8 + $0x2c] sm:$0xf]
    %v350 = vld [vmem:[#allocation8 + $0x30] sm:$0xf]
    %v351 = vld [vmem:[#allocation8 + $0x34] sm:$0xf]
    %v352 = vld [vmem:[#allocation8 + $0x38] sm:$0xf]
    %v353 = vld [vmem:[#allocation8 + $0x3c] sm:$0xf]
    %v354 = vld [vmem:[#allocation8 + $0x40] sm:$0xf]
    %v355 = vld [vmem:[#allocation8 + $0x44] sm:$0xf]
    %v356 = vld [vmem:[#allocation8 + $0x48] sm:$0xf]
    %v357 = vld [vmem:[#allocation8 + $0x4c] sm:$0xf]
    %v358 = vld [vmem:[#allocation8 + $0x50] sm:$0xf]
    %v359 = vld [vmem:[#allocation8 + $0x54] sm:$0xf]
    %v360 = vld [vmem:[#allocation8 + $0x58] sm:$0xf]
    %v361 = vld [vmem:[#allocation8 + $0x5c] sm:$0xf]
    %v362 = vld [vmem:[#allocation8 + $0x60] sm:$0xf]
    %v363 = vld [vmem:[#allocation8 + $0x64] sm:$0xf]
    %v364 = vld [vmem:[#allocation8 + $0x68] sm:$0xf]
    %v365 = vld [vmem:[#allocation8 + $0x6c] sm:$0xf]
    %v366 = vld [vmem:[#allocation8 + $0x70] sm:$0xf]
    %v367 = vld [vmem:[#allocation8 + $0x74] sm:$0xf]
    %v368 = vld [vmem:[#allocation8 + $0x78] sm:$0xf]
    %v369 = vld [vmem:[#allocation8 + $0x7c] sm:$0xf]
    %v370 = vld [vmem:[%s4] sm:$0x1]
    %v372 = vperm.slane %v370, 0
    %v406 = vunpack.c.l.b16 %v338
    %v407 = vunpack.c.l.b16 %v339
    %v408 = vunpack.c.l.b16 %v340
    %v409 = vunpack.c.l.b16 %v341
    %v410 = vunpack.c.l.b16 %v342
    %v411 = vunpack.c.l.b16 %v343
    %v412 = vunpack.c.l.b16 %v344
    %v413 = vunpack.c.l.b16 %v345
    %v414 = vunpack.c.l.b16 %v346
    %v415 = vunpack.c.l.b16 %v347
    %v416 = vunpack.c.l.b16 %v348
    %v417 = vunpack.c.l.b16 %v349
    %v418 = vunpack.c.l.b16 %v350
    %v419 = vunpack.c.l.b16 %v351
    %v420 = vunpack.c.l.b16 %v352
    %v421 = vunpack.c.l.b16 %v353
    %v422 = vunpack.c.l.b16 %v354
    %v423 = vunpack.c.l.b16 %v355
    %v424 = vunpack.c.l.b16 %v356
    %v425 = vunpack.c.l.b16 %v357
    %v426 = vunpack.c.l.b16 %v358
    %v427 = vunpack.c.l.b16 %v359
    %v428 = vunpack.c.l.b16 %v360
    %v429 = vunpack.c.l.b16 %v361
    %v430 = vunpack.c.l.b16 %v362
    %v431 = vunpack.c.l.b16 %v363
    %v432 = vunpack.c.l.b16 %v364
    %v433 = vunpack.c.l.b16 %v365
    %v434 = vunpack.c.l.b16 %v366
    %v435 = vunpack.c.l.b16 %v367
    %v436 = vunpack.c.l.b16 %v368
    %v437 = vunpack.c.l.b16 %v369
    %v438 = vpack.c.b16 %v407, %v406
    %v439 = vpack.c.b16 %v409, %v408
    %v440 = vpack.c.b16 %v411, %v410
    %v441 = vpack.c.b16 %v413, %v412
    %v442 = vpack.c.b16 %v415, %v414
    %v443 = vpack.c.b16 %v417, %v416
    %v444 = vpack.c.b16 %v419, %v418
    %v445 = vpack.c.b16 %v421, %v420
    %v446 = vpack.c.b16 %v423, %v422
    %v447 = vpack.c.b16 %v425, %v424
    %v448 = vpack.c.b16 %v427, %v426
    %v449 = vpack.c.b16 %v429, %v428
    %v450 = vpack.c.b16 %v431, %v430
    %v451 = vpack.c.b16 %v433, %v432
    %v452 = vpack.c.b16 %v435, %v434
    %v453 = vpack.c.b16 %v437, %v436
    %470 = vmatpush.bf16.msra.mxu0 %v445
    %471 = vmatpush.bf16.msra.mxu0 %v444
    %472 = vmatpush.bf16.msra.mxu0 %v443
    %473 = vmatpush.bf16.msra.mxu0 %v442
    %474 = vmatpush.bf16.msra.mxu0 %v441
    %475 = vmatpush.bf16.msra.mxu0 %v440
    %476 = vmatpush.bf16.msra.mxu0 %v439
    %477 = vmatpush.bf16.msra.mxu0 %v438
    %478 = vmatmul.bf16.gmra.mxu0 %v336
    %v479 = vpop.f32.mrf.mxu0
    %v480 = vadd.f32 %v372, %v479
    %v481 = vpop.f32.mrf.mxu0
    %v482 = vadd.f32 %v372, %v481
    %483 = vdwg.mxu0
    %484 = vmatpush.bf16.msra.mxu0 %v453
    %485 = vmatpush.bf16.msra.mxu0 %v452
    %486 = vmatpush.bf16.msra.mxu0 %v451
    %487 = vmatpush.bf16.msra.mxu0 %v450
    %488 = vmatpush.bf16.msra.mxu0 %v449
    %489 = vmatpush.bf16.msra.mxu0 %v448
    %490 = vmatpush.bf16.msra.mxu0 %v447
    %491 = vmatpush.bf16.msra.mxu0 %v446
    %492 = vmatmul.bf16.gmra.mxu0 %v337
    %v493 = vpop.f32.mrf.mxu0
    %v494 = vadd.f32 %v480, %v493
    %v495 = vpop.f32.mrf.mxu0
    %v496 = vadd.f32 %v482, %v495
    %497 = vdwg.mxu0
    %498 = vst [vmem:[#allocation10] sm:$0xff] %v494
    %499 = vst [vmem:[#allocation10 + $0x8] sm:$0xff] %v496
    // Predicated region
    $region38: #{tpu_custom_call.1} parent=1 // pred_check
      _
    $region39: #{tpu_custom_call.1} parent=1 // pred_check_branch
      %501 = sbr.rel (0) target = $region41
    $region40: #{tpu_custom_call.1} parent=1 // pred_region
      %503 = vsyncadd [#allocation4], 0
      %s504 = sshll.u32 [#allocation10], 4
      %s505 = int_to_ptr.vmem [resolvable:$true] %s504
      %s506 = sshll.u32 %s5, 4
      %s507 = int_to_ptr.hbm [resolvable:$true] %s506
      %512 = dma.vmem_to_hbm [thread:$0]  %s505, 256, %s507, [#allocation4], 128, 128, 8
    $region41: #{tpu_custom_call.1} parent=1 // pred_fallthru
      _
    // Predicated region
    $region42: #{tpu_custom_call.1} parent=1 // pred_check
      _
    $region43: #{tpu_custom_call.1} parent=1 // pred_check_branch
      %514 = sbr.rel (0) target = $region45
    $region44: #{tpu_custom_call.1} parent=1 // pred_region
      %516 = dma.done [#allocation4], 256
    $region45: #{tpu_custom_call.1} parent=1 // pred_fallthru
      _
    %517 = vsyncpa [#allocation3], 1
    %518 = vsyncpa [#allocation6], 1
    %519 = vsyncpa [#allocation9], 1
    %520 = vsyncpa [#allocation4], 1

// kernel: tpu_custom_call.1
$region0: #{tpu_custom_call.1}
  #allocation0 [shape = 'u32[]', space=smem, size = 0x4, offset = 0x4, fixed_abs, tag = 'smem constant byte address 0x4 - core index']
  #allocation1 [shape = 'u32[72,128]{1,0:T(1,128)}', space=vmem, size = 0x9000, scoped, tag = 'internal scratch']
  %s0 = inlined_call_operand.hbm [shape: bf16[16,128], index: 0, kind: input, shape index: {}]
  %s1 = inlined_call_operand.hbm [shape: bf16[128,256], index: 1, kind: input, shape index: {}]
  %s2 = inlined_call_operand.hbm [shape: f32[1,256], index: 2, kind: input, shape index: {}]
  %s3 = inlined_call_operand.hbm [shape: bf16[256,128], index: 3, kind: input, shape index: {}]
  %s4 = inlined_call_operand.vmem [shape: f32[1,128], index: 4, kind: input, shape index: {}]
  %s5 = inlined_call_operand.hbm [shape: f32[16,128], index: 5, kind: output, shape index: {}]
  %s6 = sld [smem:[#allocation0]]
  $region46: #{tpu_custom_call.1} parent=0
    _
  %s8 = ssub.s32 1, %s6
  %s9 = scalar_select 0, %s8, %s6
  $region1: #{tpu_custom_call.1} parent=0
    #allocation2 [shape = 'u8[4096]{0}', space=vmem, size = 0x1000, scoped, tag = 'input window, operand 0, single buffered']
    #allocation3 [shape = 's32[1]{0}', space=sflag, size = 0x4, scoped, tag = 'scoped memory for tpu_custom_call.1']
    #allocation4 [shape = 's32[1]{0}', space=sflag, size = 0x4, scoped, tag = 'scoped memory for tpu_custom_call.1']
    #allocation5 [shape = 'u8[65536]{0}', space=vmem, size = 0x10000, scoped, tag = 'input window, operand 1, single buffered']
    #allocation6 [shape = 's32[1]{0}', space=sflag, size = 0x4, scoped, tag = 'scoped memory for tpu_custom_call.1']
    #allocation7 [shape = 'u8[1024]{0}', space=vmem, size = 0x400, scoped, tag = 'input window, operand 2, single buffered']
    #allocation8 [shape = 'u8[65536]{0}', space=vmem, size = 0x10000, scoped, tag = 'input window, operand 3, single buffered']
    #allocation9 [shape = 's32[1]{0}', space=sflag, size = 0x4, scoped, tag = 'scoped memory for tpu_custom_call.1']
    #allocation10 [shape = 'u8[8192]{0}', space=vmem, size = 0x2000, scoped, tag = 'output window, operand 0, single buffered']
    %10 = vsyncpa [#allocation3], 0
    %11 = vsyncpa [#allocation6], 0
    %12 = vsyncpa [#allocation9], 0
    %13 = vsyncpa [#allocation4], 0
    // Predicated region
    $region2: #{tpu_custom_call.1} parent=1 // pred_check
      _
    $region3: #{tpu_custom_call.1} parent=1 // pred_check_branch
      %15 = sbr.rel (0) target = $region5
    $region4: #{tpu_custom_call.1} parent=1 // pred_region
      %17 = vsyncadd [#allocation3], 0
      %s18 = sshll.u32 %s0, 4
      %s19 = int_to_ptr.hbm [resolvable:$true] %s18
      %s20 = sshll.u32 [#allocation2], 4
      %s21 = int_to_ptr.vmem [resolvable:$true] %s20
      %26 = dma.hbm_to_vmem [thread:$0]  %s19, 128, %s21, [#allocation3], 64, 64, 4
    $region5: #{tpu_custom_call.1} parent=1 // pred_fallthru
      _
    // Predicated region
    $region6: #{tpu_custom_call.1} parent=1 // pred_check
      _
    $region7: #{tpu_custom_call.1} parent=1 // pred_check_branch
      %28 = sbr.rel (0) target = $region9
    $region8: #{tpu_custom_call.1} parent=1 // pred_region
      %30 = vsyncadd [#allocation6], 0
      %s31 = sshll.u32 %s1, 4
      %s32 = int_to_ptr.hbm [resolvable:$true] %s31
      %s33 = sshll.u32 [#allocation5], 4
      %s34 = int_to_ptr.vmem [resolvable:$true] %s33
      %39 = dma.hbm_to_vmem [thread:$0]  %s32, 2048, %s34, [#allocation6], 128, 128, 8
    $region9: #{tpu_custom_call.1} parent=1 // pred_fallthru
      _
    // Predicated region
    $region10: #{tpu_custom_call.1} parent=1 // pred_check
      _
    $region11: #{tpu_custom_call.1} parent=1 // pred_check_branch
      %41 = sbr.rel (0) target = $region13
    $region12: #{tpu_custom_call.1} parent=1 // pred_region
      %43 = vsyncadd [#allocation6], 0
      %s45 = sshll.u32 %s2, 4
      %s46 = int_to_ptr.hbm [resolvable:$true] %s45
      %s47 = sshll.u32 [#allocation7], 4
      %s48 = int_to_ptr.vmem [resolvable:$true] %s47
      %50 = dma.hbm_to_vmem [thread:$0]  %s46, 32, %s48, [#allocation6]
    $region13: #{tpu_custom_call.1} parent=1 // pred_fallthru
      _
    // Predicated region
    $region14: #{tpu_custom_call.1} parent=1 // pred_check
      _
    $region15: #{tpu_custom_call.1} parent=1 // pred_check_branch
      %52 = sbr.rel (0) target = $region17
    $region16: #{tpu_custom_call.1} parent=1 // pred_region
      %54 = vsyncadd [#allocation9], 0
      %s55 = sshll.u32 %s3, 4
      %s56 = int_to_ptr.hbm [resolvable:$true] %s55
      %s57 = sshll.u32 [#allocation8], 4
      %s58 = int_to_ptr.vmem [resolvable:$true] %s57
      %63 = dma.hbm_to_vmem [thread:$0]  %s56, 2048, %s58, [#allocation9], 64, 64, 4
    $region17: #{tpu_custom_call.1} parent=1 // pred_fallthru
      _
    // Predicated region
    $region18: #{tpu_custom_call.1} parent=1 // pred_check
      _
    $region19: #{tpu_custom_call.1} parent=1 // pred_check_branch
      %65 = sbr.rel (0) target = $region21
    $region20: #{tpu_custom_call.1} parent=1 // pred_region
      _
    $region21: #{tpu_custom_call.1} parent=1 // pred_fallthru
      _
    // Predicated region
    $region22: #{tpu_custom_call.1} parent=1 // pred_check
      _
    $region23: #{tpu_custom_call.1} parent=1 // pred_check_branch
      %67 = sbr.rel (0) target = $region25
    $region24: #{tpu_custom_call.1} parent=1 // pred_region
      %69 = dma.done [#allocation3], 128
    $region25: #{tpu_custom_call.1} parent=1 // pred_fallthru
      _
    // Predicated region
    $region26: #{tpu_custom_call.1} parent=1 // pred_check
      _
    $region27: #{tpu_custom_call.1} parent=1 // pred_check_branch
      %71 = sbr.rel (0) target = $region29
    $region28: #{tpu_custom_call.1} parent=1 // pred_region
      %73 = dma.done [#allocation6], 2048
    $region29: #{tpu_custom_call.1} parent=1 // pred_fallthru
      _
    // Predicated region
    $region30: #{tpu_custom_call.1} parent=1 // pred_check
      _
    $region31: #{tpu_custom_call.1} parent=1 // pred_check_branch
      %75 = sbr.rel (0) target = $region33
    $region32: #{tpu_custom_call.1} parent=1 // pred_region
      %77 = dma.done [#allocation6], 32
    $region33: #{tpu_custom_call.1} parent=1 // pred_fallthru
      _
    // Predicated region
    $region34: #{tpu_custom_call.1} parent=1 // pred_check
      _
    $region35: #{tpu_custom_call.1} parent=1 // pred_check_branch
      %79 = sbr.rel (0) target = $region37
    $region36: #{tpu_custom_call.1} parent=1 // pred_region
      %81 = dma.done [#allocation9], 2048
    $region37: #{tpu_custom_call.1} parent=1 // pred_fallthru
      _
    %v82 = vld [vmem:[#allocation2] sm:$0xf]
    %v83 = vld [vmem:[#allocation2 + $0x4] sm:$0xf]
    %v84 = vld [vmem:[#allocation5] sm:$0xff]
    %v85 = vld [vmem:[#allocation5 + $0x8] sm:$0xff]
    %v86 = vld [vmem:[#allocation5 + $0x10] sm:$0xff]
    %v87 = vld [vmem:[#allocation5 + $0x18] sm:$0xff]
    %v88 = vld [vmem:[#allocation5 + $0x20] sm:$0xff]
    %v89 = vld [vmem:[#allocation5 + $0x28] sm:$0xff]
    %v90 = vld [vmem:[#allocation5 + $0x30] sm:$0xff]
    %v91 = vld [vmem:[#allocation5 + $0x38] sm:$0xff]
    %v92 = vld [vmem:[#allocation5 + $0x40] sm:$0xff]
    %v93 = vld [vmem:[#allocation5 + $0x48] sm:$0xff]
    %v94 = vld [vmem:[#allocation5 + $0x50] sm:$0xff]
    %v95 = vld [vmem:[#allocation5 + $0x58] sm:$0xff]
    %v96 = vld [vmem:[#allocation5 + $0x60] sm:$0xff]
    %v97 = vld [vmem:[#allocation5 + $0x68] sm:$0xff]
    %v98 = vld [vmem:[#allocation5 + $0x70] sm:$0xff]
    %v99 = vld [vmem:[#allocation5 + $0x78] sm:$0xff]
    %v102 = vunpack.c.l.b16 %v82
    %v103 = vunpack.c.l.b16 %v83
    %v104 = vpack.c.b16 %v103, %v102
    %v122 = vunpack.c.l.b16 %v84
    %v123 = vunpack.c.h.b16 %v84
    %v124 = vunpack.c.l.b16 %v85
    %v125 = vunpack.c.h.b16 %v85
    %v126 = vunpack.c.l.b16 %v86
    %v127 = vunpack.c.h.b16 %v86
    %v128 = vunpack.c.l.b16 %v87
    %v129 = vunpack.c.h.b16 %v87
    %v130 = vunpack.c.l.b16 %v88
    %v131 = vunpack.c.h.b16 %v88
    %v132 = vunpack.c.l.b16 %v89
    %v133 = vunpack.c.h.b16 %v89
    %v134 = vunpack.c.l.b16 %v90
    %v135 = vunpack.c.h.b16 %v90
    %v136 = vunpack.c.l.b16 %v91
    %v137 = vunpack.c.h.b16 %v91
    %v138 = vunpack.c.l.b16 %v92
    %v139 = vunpack.c.h.b16 %v92
    %v140 = vunpack.c.l.b16 %v93
    %v141 = vunpack.c.h.b16 %v93
    %v142 = vunpack.c.l.b16 %v94
    %v143 = vunpack.c.h.b16 %v94
    %v144 = vunpack.c.l.b16 %v95
    %v145 = vunpack.c.h.b16 %v95
    %v146 = vunpack.c.l.b16 %v96
    %v147 = vunpack.c.h.b16 %v96
    %v148 = vunpack.c.l.b16 %v97
    %v149 = vunpack.c.h.b16 %v97
    %v150 = vunpack.c.l.b16 %v98
    %v151 = vunpack.c.h.b16 %v98
    %v152 = vunpack.c.l.b16 %v99
    %v153 = vunpack.c.h.b16 %v99
    %v154 = vpack.c.b16 %v124, %v122
    %v155 = vpack.c.b16 %v125, %v123
    %v156 = vpack.c.b16 %v128, %v126
    %v157 = vpack.c.b16 %v129, %v127
    %v158 = vpack.c.b16 %v132, %v130
    %v159 = vpack.c.b16 %v133, %v131
    %v160 = vpack.c.b16 %v136, %v134
    %v161 = vpack.c.b16 %v137, %v135
    %v162 = vpack.c.b16 %v140, %v138
    %v163 = vpack.c.b16 %v141, %v139
    %v164 = vpack.c.b16 %v144, %v142
    %v165 = vpack.c.b16 %v145, %v143
    %v166 = vpack.c.b16 %v148, %v146
    %v167 = vpack.c.b16 %v149, %v147
    %v168 = vpack.c.b16 %v152, %v150
    %v169 = vpack.c.b16 %v153, %v151
    %186 = vmatpush.bf16.msra.mxu0 %v168
    %187 = vmatpush.bf16.msra.mxu0 %v166
    %188 = vmatpush.bf16.msra.mxu0 %v164
    %189 = vmatpush.bf16.msra.mxu0 %v162
    %190 = vmatpush.bf16.msra.mxu0 %v160
    %191 = vmatpush.bf16.msra.mxu0 %v158
    %192 = vmatpush.bf16.msra.mxu0 %v156
    %193 = vmatpush.bf16.msra.mxu0 %v154
    %194 = vmatmul.bf16.gmra.mxu0 %v104
    %v195 = vpop.f32.mrf.mxu0
    %v196 = vadd.f32 0.0, %v195
    %v197 = vpop.f32.mrf.mxu0
    %v198 = vadd.f32 0.0, %v197
    %199 = vdwg.mxu0
    %200 = vmatpush.bf16.msra.mxu0 %v169
    %201 = vmatpush.bf16.msra.mxu0 %v167
    %202 = vmatpush.bf16.msra.mxu0 %v165
    %203 = vmatpush.bf16.msra.mxu0 %v163
    %204 = vmatpush.bf16.msra.mxu0 %v161
    %205 = vmatpush.bf16.msra.mxu0 %v159
    %206 = vmatpush.bf16.msra.mxu0 %v157
    %207 = vmatpush.bf16.msra.mxu0 %v155
    %208 = vmatmul.bf16.gmra.mxu0 %v104
    %v209 = vpop.f32.mrf.mxu0
    %v210 = vadd.f32 0.0, %v209
    %v211 = vpop.f32.mrf.mxu0
    %v212 = vadd.f32 0.0, %v211
    %213 = vdwg.mxu0
    %v214 = vpack.c.bf16 %v210, %v196
    %v215 = vpack.c.bf16 %v212, %v198
    %v216 = vld [vmem:[#allocation7] sm:$0x3]
    %v218 = vperm.slane %v216, 0
    %v219 = vperm.slane %v216, 1
    %v222 = vpack.c.bf16 %v219, %v218
    %v224 = vunpack.c.l.b16 %v222
    %v225 = vunpack.c.h.b16 %v222
    %v226 = vpack.c.b16 %v224, %v224
    %v227 = vpack.c.b16 %v225, %v225
    %v229 = vpack.i.b16 %v226, %v226
    %v231 = vperm.slane %v229, 0
    %v233 = vpack.i.b16 %v227, %v227
    %v235 = vperm.slane %v233, 0
    %v236 = vunpack.c.l.bf16 %v214
    %v237 = vunpack.c.h.bf16 %v214
    %v238 = vunpack.c.l.bf16 %v215
    %v239 = vunpack.c.h.bf16 %v215
    %v240 = vunpack.c.l.bf16 %v231
    %v241 = vunpack.c.l.bf16 %v235
    %v242 = vadd.f32 %v236, %v240
    %v243 = vadd.f32 %v237, %v241
    %v244 = vadd.f32 %v238, %v240
    %v245 = vadd.f32 %v239, %v241
    %v246 = vpack.c.bf16 %v243, %v242
    %v247 = vpack.c.bf16 %v245, %v244
    %v248 = vunpack.c.l.bf16 %v246
    %v249 = vunpack.c.h.bf16 %v246
    %v250 = vunpack.c.l.bf16 %v247
    %v251 = vunpack.c.h.bf16 %v247
    %v252 = vmul.f32 %v248, %v248
    %v253 = vmul.f32 %v249, %v249
    %v254 = vmul.f32 %v250, %v250
    %v255 = vmul.f32 %v251, %v251
    %v256 = vpack.c.bf16 %v253, %v252
    %v257 = vpack.c.bf16 %v255, %v254
    %v258 = vunpack.c.l.bf16 %v256
    %v259 = vunpack.c.h.bf16 %v256
    %v260 = vunpack.c.l.bf16 %v257
    %v261 = vunpack.c.h.bf16 %v257
    %v262 = vmul.f32 %v248, %v258
    %v263 = vmul.f32 %v249, %v259
    %v264 = vmul.f32 %v250, %v260
    %v265 = vmul.f32 %v251, %v261
    %v266 = vpack.c.bf16 %v263, %v262
    %v267 = vpack.c.bf16 %v265, %v264
    %v268 = vunpack.c.l.bf16 %v266
    %v269 = vunpack.c.h.bf16 %v266
    %v270 = vunpack.c.l.bf16 %v267
    %v271 = vunpack.c.h.bf16 %v267
    %v272 = vmul.f32 %v268, 0.044677734
    %v273 = vmul.f32 %v269, 0.044677734
    %v274 = vmul.f32 %v270, 0.044677734
    %v275 = vmul.f32 %v271, 0.044677734
    %v276 = vpack.c.bf16 %v273, %v272
    %v277 = vpack.c.bf16 %v275, %v274
    %v278 = vunpack.c.l.bf16 %v276
    %v279 = vunpack.c.h.bf16 %v276
    %v280 = vunpack.c.l.bf16 %v277
    %v281 = vunpack.c.h.bf16 %v277
    %v282 = vadd.f32 %v248, %v278
    %v283 = vadd.f32 %v249, %v279
    %v284 = vadd.f32 %v250, %v280
    %v285 = vadd.f32 %v251, %v281
    %v286 = vpack.c.bf16 %v283, %v282
    %v287 = vpack.c.bf16 %v285, %v284
    %v288 = vunpack.c.l.bf16 %v286
    %v289 = vunpack.c.h.bf16 %v286
    %v290 = vunpack.c.l.bf16 %v287
    %v291 = vunpack.c.h.bf16 %v287
    %v292 = vmul.f32 %v288, 0.796875
    %v293 = vmul.f32 %v289, 0.796875
    %v294 = vmul.f32 %v290, 0.796875
    %v295 = vmul.f32 %v291, 0.796875
    %v296 = vpack.c.bf16 %v293, %v292
    %v297 = vpack.c.bf16 %v295, %v294
    %v298 = vunpack.c.l.bf16 %v296
    %v299 = vunpack.c.h.bf16 %v296
    %v300 = vunpack.c.l.bf16 %v297
    %v301 = vunpack.c.h.bf16 %v297
    %v302 = vtanh.pop %v298
    %v303 = vtanh.pop %v299
    %v304 = vtanh.pop %v300
    %v305 = vtanh.pop %v301
    %v306 = vpack.c.bf16 %v303, %v302
    %v307 = vpack.c.bf16 %v305, %v304
    %v308 = vunpack.c.l.bf16 %v306
    %v309 = vunpack.c.h.bf16 %v306
    %v310 = vunpack.c.l.bf16 %v307
    %v311 = vunpack.c.h.bf16 %v307
    %v312 = vadd.f32 %v308, 1.0
    %v313 = vadd.f32 %v309, 1.0
    %v314 = vadd.f32 %v310, 1.0
    %v315 = vadd.f32 %v311, 1.0
    %v316 = vpack.c.bf16 %v313, %v312
    %v317 = vpack.c.bf16 %v315, %v314
    %v318 = vunpack.c.l.bf16 %v316
    %v319 = vunpack.c.h.bf16 %v316
    %v320 = vunpack.c.l.bf16 %v317
    %v321 = vunpack.c.h.bf16 %v317
    %v322 = vmul.f32 %v318, 0.5
    %v323 = vmul.f32 %v319, 0.5
    %v324 = vmul.f32 %v320, 0.5
    %v325 = vmul.f32 %v321, 0.5
    %v326 = vpack.c.bf16 %v323, %v322
    %v327 = vpack.c.bf16 %v325, %v324
    %v328 = vunpack.c.l.bf16 %v326
    %v329 = vunpack.c.h.bf16 %v326
    %v330 = vunpack.c.l.bf16 %v327
    %v331 = vunpack.c.h.bf16 %v327
    %v332 = vmul.f32 %v248, %v328
    %v333 = vmul.f32 %v249, %v329
    %v334 = vmul.f32 %v250, %v330
    %v335 = vmul.f32 %v251, %v331
    %v336 = vpack.c.bf16 %v334, %v332
    %v337 = vpack.c.bf16 %v335, %v333
    %v338 = vld [vmem:[#allocation8] sm:$0xf]
    %v339 = vld [vmem:[#allocation8 + $0x4] sm:$0xf]
    %v340 = vld [vmem:[#allocation8 + $0x8] sm:$0xf]
    %v341 = vld [vmem:[#allocation8 + $0xc] sm:$0xf]
    %v342 = vld [vmem:[#allocation8 + $0x10] sm:$0xf]
    %v343 = vld [vmem:[#allocation8 + $0x14] sm:$0xf]
    %v344 = vld [vmem:[#allocation8 + $0x18] sm:$0xf]
    %v345 = vld [vmem:[#allocation8 + $0x1c] sm:$0xf]
    %v346 = vld [vmem:[#allocation8 + $0x20] sm:$0xf]
    %v347 = vld [vmem:[#allocation8 + $0x24] sm:$0xf]
    %v348 = vld [vmem:[#allocation8 + $0x28] sm:$0xf]
    %v349 = vld [vmem:[#allocation8 + $0x2c] sm:$0xf]
    %v350 = vld [vmem:[#allocation8 + $0x30] sm:$0xf]
    %v351 = vld [vmem:[#allocation8 + $0x34] sm:$0xf]
    %v352 = vld [vmem:[#allocation8 + $0x38] sm:$0xf]
    %v353 = vld [vmem:[#allocation8 + $0x3c] sm:$0xf]
    %v354 = vld [vmem:[#allocation8 + $0x40] sm:$0xf]
    %v355 = vld [vmem:[#allocation8 + $0x44] sm:$0xf]
    %v356 = vld [vmem:[#allocation8 + $0x48] sm:$0xf]
    %v357 = vld [vmem:[#allocation8 + $0x4c] sm:$0xf]
    %v358 = vld [vmem:[#allocation8 + $0x50] sm:$0xf]
    %v359 = vld [vmem:[#allocation8 + $0x54] sm:$0xf]
    %v360 = vld [vmem:[#allocation8 + $0x58] sm:$0xf]
    %v361 = vld [vmem:[#allocation8 + $0x5c] sm:$0xf]
    %v362 = vld [vmem:[#allocation8 + $0x60] sm:$0xf]
    %v363 = vld [vmem:[#allocation8 + $0x64] sm:$0xf]
    %v364 = vld [vmem:[#allocation8 + $0x68] sm:$0xf]
    %v365 = vld [vmem:[#allocation8 + $0x6c] sm:$0xf]
    %v366 = vld [vmem:[#allocation8 + $0x70] sm:$0xf]
    %v367 = vld [vmem:[#allocation8 + $0x74] sm:$0xf]
    %v368 = vld [vmem:[#allocation8 + $0x78] sm:$0xf]
    %v369 = vld [vmem:[#allocation8 + $0x7c] sm:$0xf]
    %v370 = vld [vmem:[%s4] sm:$0x1]
    %v372 = vperm.slane %v370, 0
    %v406 = vunpack.c.l.b16 %v338
    %v407 = vunpack.c.l.b16 %v339
    %v408 = vunpack.c.l.b16 %v340
    %v409 = vunpack.c.l.b16 %v341
    %v410 = vunpack.c.l.b16 %v342
    %v411 = vunpack.c.l.b16 %v343
    %v412 = vunpack.c.l.b16 %v344
    %v413 = vunpack.c.l.b16 %v345
    %v414 = vunpack.c.l.b16 %v346
    %v415 = vunpack.c.l.b16 %v347
    %v416 = vunpack.c.l.b16 %v348
    %v417 = vunpack.c.l.b16 %v349
    %v418 = vunpack.c.l.b16 %v350
    %v419 = vunpack.c.l.b16 %v351
    %v420 = vunpack.c.l.b16 %v352
    %v421 = vunpack.c.l.b16 %v353
    %v422 = vunpack.c.l.b16 %v354
    %v423 = vunpack.c.l.b16 %v355
    %v424 = vunpack.c.l.b16 %v356
    %v425 = vunpack.c.l.b16 %v357
    %v426 = vunpack.c.l.b16 %v358
    %v427 = vunpack.c.l.b16 %v359
    %v428 = vunpack.c.l.b16 %v360
    %v429 = vunpack.c.l.b16 %v361
    %v430 = vunpack.c.l.b16 %v362
    %v431 = vunpack.c.l.b16 %v363
    %v432 = vunpack.c.l.b16 %v364
    %v433 = vunpack.c.l.b16 %v365
    %v434 = vunpack.c.l.b16 %v366
    %v435 = vunpack.c.l.b16 %v367
    %v436 = vunpack.c.l.b16 %v368
    %v437 = vunpack.c.l.b16 %v369
    %v438 = vpack.c.b16 %v407, %v406
    %v439 = vpack.c.b16 %v409, %v408
    %v440 = vpack.c.b16 %v411, %v410
    %v441 = vpack.c.b16 %v413, %v412
    %v442 = vpack.c.b16 %v415, %v414
    %v443 = vpack.c.b16 %v417, %v416
    %v444 = vpack.c.b16 %v419, %v418
    %v445 = vpack.c.b16 %v421, %v420
    %v446 = vpack.c.b16 %v423, %v422
    %v447 = vpack.c.b16 %v425, %v424
    %v448 = vpack.c.b16 %v427, %v426
    %v449 = vpack.c.b16 %v429, %v428
    %v450 = vpack.c.b16 %v431, %v430
    %v451 = vpack.c.b16 %v433, %v432
    %v452 = vpack.c.b16 %v435, %v434
    %v453 = vpack.c.b16 %v437, %v436
    %470 = vmatpush.bf16.msra.mxu0 %v445
    %471 = vmatpush.bf16.msra.mxu0 %v444
    %472 = vmatpush.bf16.msra.mxu0 %v443
    %473 = vmatpush.bf16.msra.mxu0 %v442
    %474 = vmatpush.bf16.msra.mxu0 %v441
    %475 = vmatpush.bf16.msra.mxu0 %v440
    %476 = vmatpush.bf16.msra.mxu0 %v439
    %477 = vmatpush.bf16.msra.mxu0 %v438
    %478 = vmatmul.bf16.gmra.mxu0 %v336
    %v479 = vpop.f32.mrf.mxu0
    %v480 = vadd.f32 %v372, %v479
    %v481 = vpop.f32.mrf.mxu0
    %v482 = vadd.f32 %v372, %v481
    %483 = vdwg.mxu0
    %484 = vmatpush.bf16.msra.mxu0 %v453
    %485 = vmatpush.bf16.msra.mxu0 %v452
    %486 = vmatpush.bf16.msra.mxu0 %v451
    %487 = vmatpush.bf16.msra.mxu0 %v450
    %488 = vmatpush.bf16.msra.mxu0 %v449
    %489 = vmatpush.bf16.msra.mxu0 %v448
    %490 = vmatpush.bf16.msra.mxu0 %v447
    %491 = vmatpush.bf16.msra.mxu0 %v446
    %492 = vmatmul.bf16.gmra.mxu0 %v337
    %v493 = vpop.f32.mrf.mxu0
    %v494 = vadd.f32 %v480, %v493
    %v495 = vpop.f32.mrf.mxu0
    %v496 = vadd.f32 %v482, %v495
    %497 = vdwg.mxu0
    %498 = vst [vmem:[#allocation10] sm:$0xff] %v494
    %499 = vst [vmem:[#allocation10 + $0x8] sm:$0xff] %v496
    // Predicated region
    $region38: #{tpu_custom_call.1} parent=1 // pred_check
      _
    $region39: #{tpu_custom_call.1} parent=1 // pred_check_branch
      %501 = sbr.rel (0) target = $region41
    $region40: #{tpu_custom_call.1} parent=1 // pred_region
      %503 = vsyncadd [#allocation4], 0
      %s504 = sshll.u32 [#allocation10], 4
      %s505 = int_to_ptr.vmem [resolvable:$true] %s504
      %s506 = sshll.u32 %s5, 4
      %s507 = int_to_ptr.hbm [resolvable:$true] %s506
      %512 = dma.vmem_to_hbm [thread:$0]  %s505, 256, %s507, [#allocation4], 128, 128, 8
    $region41: #{tpu_custom_call.1} parent=1 // pred_fallthru
      _
    // Predicated region
    $region42: #{tpu_custom_call.1} parent=1 // pred_check
      _
    $region43: #{tpu_custom_call.1} parent=1 // pred_check_branch
      %514 = sbr.rel (0) target = $region45
    $region44: #{tpu_custom_call.1} parent=1 // pred_region
      %516 = dma.done [#allocation4], 256
    $region45: #{tpu_custom_call.1} parent=1 // pred_fallthru
      _
    %517 = vsyncpa [#allocation3], 1
    %518 = vsyncpa [#allocation6], 1
    %519 = vsyncpa [#allocation9], 1
    %520 = vsyncpa [#allocation4], 1

</llo_original>
